<compile_context>
chip_gen: v7x
topology: tpu7x:2x2x1
jax: 0.10.0
libtpu: 0.0.40
codegen_flags: <defaults>
</compile_context>

<pallas_src>
import functools

import jax
import jax.numpy as jnp
from jax import lax
from jax.experimental import pallas as pl
from jax.experimental.pallas import tpu as pltpu

BN_EPS = 1e-5


def _ladder_kernel(x_ref, w1_ref, b1_ref, gamma_ref, beta_ref, w2s_ref, b2s_ref,
                   out_ref, *, n_batch, length):
    N, L = n_batch, length
    NL = N * L

    # ---- load x (N, Cin, L) and flatten the batch onto the lane axis: (Cin, N*L)
    x = x_ref[...].astype(jnp.float32)
    x_flat = jnp.concatenate([x[n] for n in range(N)], axis=-1)      # (Cin, N*L)

    # ---- hoisted boundary masks for the k=3 conv zero-padding (per sequence)
    pos = lax.broadcasted_iota(jnp.int32, (1, NL), 1)
    not_first = (pos % L != 0).astype(jnp.float32)        # kill the l-1 tap at l == 0
    not_last = (pos % L != L - 1).astype(jnp.float32)     # kill the l+1 tap at l == L-1

    def im2col3(v):
        """(C, N*L) -> (3*C, N*L): rows = [v[l-1]; v[l]; v[l+1]] with zero halos."""
        v_prev = pltpu.roll(v, shift=1, axis=1) * not_first
        v_next = pltpu.roll(v, shift=NL - 1, axis=1) * not_last
        return jnp.concatenate([v_prev, v, v_next], axis=0)

    # ---- conv1 (k=3): single fused MXU matmul, K = 3*Cin, lane-dense along N*L
    h = jnp.dot(w1_ref[...], im2col3(x_flat),
                preferred_element_type=jnp.float32) + b1_ref[...]    # (Cout, N*L)

    # ---- BatchNorm1d (training-mode batch stats over N and L, biased var) + ReLU
    mean = jnp.mean(h, axis=1, keepdims=True)                        # (Cout, 1)
    var = jnp.mean((h - mean) * (h - mean), axis=1, keepdims=True)   # biased, as PyTorch
    h = (h - mean) * (gamma_ref[...] * lax.rsqrt(var + BN_EPS)) + beta_ref[...]
    h = jnp.maximum(h, 0.0)

    # ---- conv2 (k=3) + skip conv (k=1) fused into ONE matmul:
    #      [W2 | Wskip] (2Co, 3Co+Ci) @ [im2col(h); x] (3Co+Ci, N*L)
    slab = jnp.concatenate([im2col3(h), x_flat], axis=0)
    y = jnp.dot(w2s_ref[...], slab,
                preferred_element_type=jnp.float32) + b2s_ref[...]   # (2Cout, N*L)

    # ---- fused store, back in NCL layout, lane-dense along L
    for n in range(N):
        out_ref[n] = y[:, n * L:(n + 1) * L].astype(out_ref.dtype)


def ladder_block(x_ncl, params):
    """x_ncl: (N, Cin, L) float32 (PyTorch NCL) -> (N, 2*Cout, L) float32."""
    w1, b1, gamma, beta, w2, b2, wskip, bskip = params
    N, Cin, L = x_ncl.shape
    Cout = w1.shape[0]
    C2 = w2.shape[0]                      # 2 * Cout

    # Tiny one-time weight re-layouts (outside the kernel):
    # (Co, Ci, 3) -> (Co, 3*Ci), tap-major, matching the im2col slab row order
    # (tap k multiplies x[l-1+k], so k=0 pairs with the "prev" rows).
    w1f = jnp.transpose(w1, (0, 2, 1)).reshape(Cout, 3 * Cin)
    w2f = jnp.transpose(w2, (0, 2, 1)).reshape(C2, 3 * Cout)
    w2s = jnp.concatenate([w2f, wskip[:, :, 0]], axis=1)             # (2Co, 3Co+Ci)
    b1c = b1.reshape(Cout, 1)
    gammac = gamma.reshape(Cout, 1)
    betac = beta.reshape(Cout, 1)
    b2s = (b2 + bskip).reshape(C2, 1)     # conv2 bias and skip bias just add

    flops = int(2 * N * L * (Cout * 3 * Cin + C2 * (3 * Cout + Cin)) + 12 * N * L * Cout)
    bytes_accessed = int(4 * (x_ncl.size + w1f.size + w2s.size + N * C2 * L
                              + 3 * Cout + C2))

    vmem = pl.BlockSpec(memory_space=pltpu.MemorySpace.VMEM)
    kernel = functools.partial(_ladder_kernel, n_batch=N, length=L)
    return pl.pallas_call(
        kernel,
        out_shape=jax.ShapeDtypeStruct((N, C2, L), jnp.float32),
        in_specs=[vmem] * 7,
        out_specs=vmem,
        compiler_params=pltpu.CompilerParams(vmem_limit_bytes=32 * 1024 * 1024),
        cost_estimate=pl.CostEstimate(flops=flops, transcendentals=int(Cout),
                                      bytes_accessed=bytes_accessed),
    )(x_ncl, w1f, b1c, gammac, betac, w2s, b2s)


def ladder_block_ref(x, params):
    """Independent pure-JAX reference (lax.conv) for correctness checking."""
    w1, b1, gamma, beta, w2, b2, wskip, bskip = params
    dn = ("NCH", "OIH", "NCH")
    hi = jax.lax.Precision.HIGHEST

    def conv(v, w, b, pad):
        y = lax.conv_general_dilated(v, w, window_strides=(1,), padding=[(pad, pad)],
                                     dimension_numbers=dn, precision=hi)
        return y + b[None, :, None]

    h = conv(x, w1, b1, 1)
    mean = jnp.mean(h, axis=(0, 2), keepdims=True)
    var = jnp.mean((h - mean) ** 2, axis=(0, 2), keepdims=True)
    h = (h - mean) / jnp.sqrt(var + BN_EPS) * gamma[None, :, None] + beta[None, :, None]
    h = jnp.maximum(h, 0.0)
    return conv(h, w2, b2, 1) + conv(x, wskip, bskip, 0)


def init_params(key, in_channels, out_channels):
    """Parameters in native PyTorch shapes: Conv1d weight = (out, in, k)."""
    ks = jax.random.split(key, 8)
    c2 = out_channels * 2
    w1 = 0.1 * jax.random.normal(ks[0], (out_channels, in_channels, 3), jnp.float32)
    b1 = 0.1 * jax.random.normal(ks[1], (out_channels,), jnp.float32)
    gamma = 1.0 + 0.1 * jax.random.normal(ks[2], (out_channels,), jnp.float32)
    beta = 0.1 * jax.random.normal(ks[3], (out_channels,), jnp.float32)
    w2 = 0.1 * jax.random.normal(ks[4], (c2, out_channels, 3), jnp.float32)
    b2 = 0.1 * jax.random.normal(ks[5], (c2,), jnp.float32)
    wskip = 0.1 * jax.random.normal(ks[6], (c2, in_channels, 1), jnp.float32)
    bskip = 0.1 * jax.random.normal(ks[7], (c2,), jnp.float32)
    return (w1, b1, gamma, beta, w2, b2, wskip, bskip)


if __name__ == "__main__":
    N, Cin, Cout, L = 2, 4, 8, 16

    key = jax.random.PRNGKey(0)
    kx, kp = jax.random.split(key)
    x = jax.random.normal(kx, (N, Cin, L), jnp.float32)     # PyTorch NCL input
    params = init_params(kp, Cin, Cout)

    out = jax.block_until_ready(ladder_block(x, params))    # (N, 2*Cout, L)
    ref = jax.block_until_ready(ladder_block_ref(x, params))

    assert out.shape == (N, 2 * Cout, L), out.shape
    max_err = float(jnp.max(jnp.abs(out - ref)))
    assert jnp.allclose(out, ref, atol=2e-3, rtol=2e-3), max_err

    print("KERNEL_OK")
</pallas_src>

<mosaic_0001>
module attributes {stable_mosaic.version = 11 : i64} {
  func.func @_ladder_kernel(%arg0: memref<2x4x16xf32, #tpu.memory_space<vmem>>, %arg1: memref<8x12xf32, #tpu.memory_space<vmem>>, %arg2: memref<8x1xf32, #tpu.memory_space<vmem>>, %arg3: memref<8x1xf32, #tpu.memory_space<vmem>>, %arg4: memref<8x1xf32, #tpu.memory_space<vmem>>, %arg5: memref<16x28xf32, #tpu.memory_space<vmem>>, %arg6: memref<16x1xf32, #tpu.memory_space<vmem>>, %arg7: memref<2x16x16xf32, #tpu.memory_space<vmem>>) attributes {dimension_semantics = [], scalar_prefetch = 0 : i64, scratch_operands = 0 : i64, tpu.core_type = #tpu.core_type<tc>} {
    %c0 = arith.constant 0 : index
    %c0_0 = arith.constant 0 : index
    %c0_1 = arith.constant 0 : index
    %0 = vector.load %arg0[%c0, %c0_0, %c0_1] : memref<2x4x16xf32, #tpu.memory_space<vmem>>, vector<2x4x16xf32>
    %1 = vector.extract_strided_slice %0 {offsets = [0, 0, 0], sizes = [1, 4, 16], strides = [1, 1, 1]} : vector<2x4x16xf32> to vector<1x4x16xf32>
    %2 = vector.shape_cast %1 : vector<1x4x16xf32> to vector<4x16xf32>
    %3 = vector.extract_strided_slice %0 {offsets = [1, 0, 0], sizes = [1, 4, 16], strides = [1, 1, 1]} : vector<2x4x16xf32> to vector<1x4x16xf32>
    %4 = vector.shape_cast %3 : vector<1x4x16xf32> to vector<4x16xf32>
    %5 = tpu.concatenate %2, %4 in 1 : vector<4x16xf32>, vector<4x16xf32> -> vector<4x32xf32>
    %6 = tpu.iota {dimensions = array<i32: 1>} : vector<1x32xi32>
    %c16_i32 = arith.constant 16 : i32
    %c0_i32 = arith.constant 0 : i32
    %7 = arith.cmpi eq, %c16_i32, %c0_i32 : i32
    %c1_i32 = arith.constant 1 : i32
    %8 = arith.select %7, %c1_i32, %c16_i32 : i32
    %9 = vector.broadcast %8 : i32 to vector<1x32xi32>
    %10 = arith.remsi %6, %9 : vector<1x32xi32>
    %c0_i32_2 = arith.constant 0 : i32
    %11 = vector.broadcast %c0_i32_2 : i32 to vector<1x32xi32>
    %12 = arith.cmpi ne, %10, %11 : vector<1x32xi32>
    %c0_i32_3 = arith.constant 0 : i32
    %13 = vector.broadcast %c0_i32_3 : i32 to vector<1x32xi32>
    %14 = arith.cmpi slt, %10, %13 : vector<1x32xi32>
    %c0_i32_4 = arith.constant 0 : i32
    %15 = arith.cmpi slt, %8, %c0_i32_4 : i32
    %16 = vector.broadcast %15 : i1 to vector<1x32xi1>
    %17 = vector.broadcast %16 : vector<1x32xi1> to vector<1x32xi1>
    %18 = arith.xori %14, %17 : vector<1x32xi1>
    %19 = arith.andi %18, %12 : vector<1x32xi1>
    %20 = vector.broadcast %8 : i32 to vector<1x32xi32>
    %21 = arith.addi %10, %20 : vector<1x32xi32>
    %22 = arith.select %19, %21, %10 : vector<1x32xi1>, vector<1x32xi32>
    %c0_i32_5 = arith.constant 0 : i32
    %23 = vector.broadcast %c0_i32_5 : i32 to vector<1x32xi32>
    %24 = arith.cmpi ne, %22, %23 : vector<1x32xi32>
    %25 = arith.extui %24 : vector<1x32xi1> to vector<1x32xi32>
    %26 = arith.sitofp %25 : vector<1x32xi32> to vector<1x32xf32>
    %c16_i32_6 = arith.constant 16 : i32
    %c0_i32_7 = arith.constant 0 : i32
    %27 = arith.cmpi eq, %c16_i32_6, %c0_i32_7 : i32
    %c1_i32_8 = arith.constant 1 : i32
    %28 = arith.select %27, %c1_i32_8, %c16_i32_6 : i32
    %29 = vector.broadcast %28 : i32 to vector<1x32xi32>
    %30 = arith.remsi %6, %29 : vector<1x32xi32>
    %c0_i32_9 = arith.constant 0 : i32
    %31 = vector.broadcast %c0_i32_9 : i32 to vector<1x32xi32>
    %32 = arith.cmpi ne, %30, %31 : vector<1x32xi32>
    %c0_i32_10 = arith.constant 0 : i32
    %33 = vector.broadcast %c0_i32_10 : i32 to vector<1x32xi32>
    %34 = arith.cmpi slt, %30, %33 : vector<1x32xi32>
    %c0_i32_11 = arith.constant 0 : i32
    %35 = arith.cmpi slt, %28, %c0_i32_11 : i32
    %36 = vector.broadcast %35 : i1 to vector<1x32xi1>
    %37 = vector.broadcast %36 : vector<1x32xi1> to vector<1x32xi1>
    %38 = arith.xori %34, %37 : vector<1x32xi1>
    %39 = arith.andi %38, %32 : vector<1x32xi1>
    %40 = vector.broadcast %28 : i32 to vector<1x32xi32>
    %41 = arith.addi %30, %40 : vector<1x32xi32>
    %42 = arith.select %39, %41, %30 : vector<1x32xi1>, vector<1x32xi32>
    %c15_i32 = arith.constant 15 : i32
    %43 = vector.broadcast %c15_i32 : i32 to vector<1x32xi32>
    %44 = arith.cmpi ne, %42, %43 : vector<1x32xi32>
    %45 = arith.extui %44 : vector<1x32xi1> to vector<1x32xi32>
    %46 = arith.sitofp %45 : vector<1x32xi32> to vector<1x32xf32>
    %c0_12 = arith.constant 0 : index
    %c0_13 = arith.constant 0 : index
    %47 = vector.load %arg1[%c0_12, %c0_13] : memref<8x12xf32, #tpu.memory_space<vmem>>, vector<8x12xf32>
    %c1_i32_14 = arith.constant 1 : i32
    %48 = tpu.dynamic_rotate %5 by %c1_i32_14 dim 1 : vector<4x32xf32>, i32 -> vector<4x32xf32>
    %49 = vector.broadcast %26 : vector<1x32xf32> to vector<4x32xf32>
    %50 = arith.mulf %48, %49 : vector<4x32xf32>
    %c31_i32 = arith.constant 31 : i32
    %51 = tpu.dynamic_rotate %5 by %c31_i32 dim 1 : vector<4x32xf32>, i32 -> vector<4x32xf32>
    %52 = vector.broadcast %46 : vector<1x32xf32> to vector<4x32xf32>
    %53 = arith.mulf %51, %52 : vector<4x32xf32>
    %54 = tpu.concatenate %50, %5, %53 in 0 : vector<4x32xf32>, vector<4x32xf32>, vector<4x32xf32> -> vector<12x32xf32>
    %cst = arith.constant dense<0.000000e+00> : vector<8x32xf32>
    %55 = tpu.matmul %47, %54, %cst {dimension_numbers = #tpu.dot_dimension_numbers<[1], [0], [0], [1], [0, 0, 1, 1], [], []>} : vector<8x12xf32>, vector<12x32xf32>, vector<8x32xf32> -> vector<8x32xf32>
    %c0_15 = arith.constant 0 : index
    %c0_16 = arith.constant 0 : index
    %56 = vector.load %arg2[%c0_15, %c0_16] : memref<8x1xf32, #tpu.memory_space<vmem>>, vector<8x1xf32>
    %57 = vector.broadcast %56 : vector<8x1xf32> to vector<8x32xf32>
    %58 = arith.addf %55, %57 : vector<8x32xf32>
    %cst_17 = arith.constant dense<0.000000e+00> : vector<8xf32>
    %59 = vector.multi_reduction <add>, %58, %cst_17 [1] : vector<8x32xf32> to vector<8xf32>
    %60 = vector.shape_cast %59 : vector<8xf32> to vector<8x1xf32>
    %cst_18 = arith.constant 3.200000e+01 : f32
    %61 = vector.broadcast %cst_18 : f32 to vector<8x1xf32>
    %62 = arith.divf %60, %61 : vector<8x1xf32>
    %63 = vector.broadcast %62 : vector<8x1xf32> to vector<8x32xf32>
    %64 = arith.subf %58, %63 : vector<8x32xf32>
    %65 = vector.broadcast %62 : vector<8x1xf32> to vector<8x32xf32>
    %66 = arith.subf %58, %65 : vector<8x32xf32>
    %67 = arith.mulf %64, %66 : vector<8x32xf32>
    %cst_19 = arith.constant dense<0.000000e+00> : vector<8xf32>
    %68 = vector.multi_reduction <add>, %67, %cst_19 [1] : vector<8x32xf32> to vector<8xf32>
    %69 = vector.shape_cast %68 : vector<8xf32> to vector<8x1xf32>
    %cst_20 = arith.constant 3.200000e+01 : f32
    %70 = vector.broadcast %cst_20 : f32 to vector<8x1xf32>
    %71 = arith.divf %69, %70 : vector<8x1xf32>
    %72 = vector.broadcast %62 : vector<8x1xf32> to vector<8x32xf32>
    %73 = arith.subf %58, %72 : vector<8x32xf32>
    %c0_21 = arith.constant 0 : index
    %c0_22 = arith.constant 0 : index
    %74 = vector.load %arg3[%c0_21, %c0_22] : memref<8x1xf32, #tpu.memory_space<vmem>>, vector<8x1xf32>
    %cst_23 = arith.constant 9.99999974E-6 : f32
    %75 = vector.broadcast %cst_23 : f32 to vector<8x1xf32>
    %76 = arith.addf %71, %75 : vector<8x1xf32>
    %77 = math.rsqrt %76 : vector<8x1xf32>
    %78 = arith.mulf %74, %77 : vector<8x1xf32>
    %79 = vector.broadcast %78 : vector<8x1xf32> to vector<8x32xf32>
    %80 = arith.mulf %73, %79 : vector<8x32xf32>
    %c0_24 = arith.constant 0 : index
    %c0_25 = arith.constant 0 : index
    %81 = vector.load %arg4[%c0_24, %c0_25] : memref<8x1xf32, #tpu.memory_space<vmem>>, vector<8x1xf32>
    %82 = vector.broadcast %81 : vector<8x1xf32> to vector<8x32xf32>
    %83 = arith.addf %80, %82 : vector<8x32xf32>
    %cst_26 = arith.constant 0.000000e+00 : f32
    %84 = vector.broadcast %cst_26 : f32 to vector<8x32xf32>
    %85 = arith.maximumf %83, %84 : vector<8x32xf32>
    %c1_i32_27 = arith.constant 1 : i32
    %86 = tpu.dynamic_rotate %85 by %c1_i32_27 dim 1 : vector<8x32xf32>, i32 -> vector<8x32xf32>
    %87 = vector.broadcast %26 : vector<1x32xf32> to vector<8x32xf32>
    %88 = arith.mulf %86, %87 : vector<8x32xf32>
    %c31_i32_28 = arith.constant 31 : i32
    %89 = tpu.dynamic_rotate %85 by %c31_i32_28 dim 1 : vector<8x32xf32>, i32 -> vector<8x32xf32>
    %90 = vector.broadcast %46 : vector<1x32xf32> to vector<8x32xf32>
    %91 = arith.mulf %89, %90 : vector<8x32xf32>
    %92 = tpu.concatenate %88, %85, %91 in 0 : vector<8x32xf32>, vector<8x32xf32>, vector<8x32xf32> -> vector<24x32xf32>
    %93 = tpu.concatenate %92, %5 in 0 : vector<24x32xf32>, vector<4x32xf32> -> vector<28x32xf32>
    %c0_29 = arith.constant 0 : index
    %c0_30 = arith.constant 0 : index
    %94 = vector.load %arg5[%c0_29, %c0_30] : memref<16x28xf32, #tpu.memory_space<vmem>>, vector<16x28xf32>
    %cst_31 = arith.constant dense<0.000000e+00> : vector<16x32xf32>
    %95 = tpu.matmul %94, %93, %cst_31 {dimension_numbers = #tpu.dot_dimension_numbers<[1], [0], [0], [1], [0, 0, 1, 1], [], []>} : vector<16x28xf32>, vector<28x32xf32>, vector<16x32xf32> -> vector<16x32xf32>
    %c0_32 = arith.constant 0 : index
    %c0_33 = arith.constant 0 : index
    %96 = vector.load %arg6[%c0_32, %c0_33] : memref<16x1xf32, #tpu.memory_space<vmem>>, vector<16x1xf32>
    %97 = vector.broadcast %96 : vector<16x1xf32> to vector<16x32xf32>
    %98 = arith.addf %95, %97 : vector<16x32xf32>
    %99 = vector.extract_strided_slice %98 {offsets = [0, 0], sizes = [16, 16], strides = [1, 1]} : vector<16x32xf32> to vector<16x16xf32>
    %c0_34 = arith.constant 0 : index
    %c0_35 = arith.constant 0 : index
    %c0_36 = arith.constant 0 : index
    %100 = vector.load %arg7[%c0_34, %c0_35, %c0_36] : memref<2x16x16xf32, #tpu.memory_space<vmem>>, vector<1x16x16xf32>
    %101 = vector.shape_cast %100 : vector<1x16x16xf32> to vector<16x16xf32>
    %102 = vector.shape_cast %99 : vector<16x16xf32> to vector<1x16x16xf32>
    tpu.vector_store %arg7[%c0_34, %c0_35, %c0_36], %102 {strides = array<i32>} : memref<2x16x16xf32, #tpu.memory_space<vmem>>, vector<1x16x16xf32>,
    %103 = vector.extract_strided_slice %98 {offsets = [0, 16], sizes = [16, 16], strides = [1, 1]} : vector<16x32xf32> to vector<16x16xf32>
    %c1 = arith.constant 1 : index
    %c0_37 = arith.constant 0 : index
    %c0_38 = arith.constant 0 : index
    %104 = vector.load %arg7[%c1, %c0_37, %c0_38] : memref<2x16x16xf32, #tpu.memory_space<vmem>>, vector<1x16x16xf32>
    %105 = vector.shape_cast %104 : vector<1x16x16xf32> to vector<16x16xf32>
    %106 = vector.shape_cast %103 : vector<16x16xf32> to vector<1x16x16xf32>
    tpu.vector_store %arg7[%c1, %c0_37, %c0_38], %106 {strides = array<i32>} : memref<2x16x16xf32, #tpu.memory_space<vmem>>, vector<1x16x16xf32>,
    return
  }
}

</mosaic_0001>

<llo_original>
// kernel: tpu_custom_call.1
$region0: #{tpu_custom_call.1}
  #allocation0 [shape = 'u32[]', space=smem, size = 0x4, offset = 0x4, fixed_abs, tag = 'smem constant byte address 0x4 - core index']
  #allocation1 [shape = 'u32[144,128]{1,0:T(1,128)}', space=vmem, size = 0x12000, scoped, tag = 'internal scratch']
  %s0 = inlined_call_operand.vmem [shape: f32[2,4,16], index: 0, kind: input, shape index: {}]
  %s1 = inlined_call_operand.vmem [shape: f32[8,12], index: 1, kind: input, shape index: {}]
  %s2 = inlined_call_operand.vmem [shape: f32[8,1], index: 2, kind: input, shape index: {}]
  %s3 = inlined_call_operand.vmem [shape: f32[8,1], index: 3, kind: input, shape index: {}]
  %s4 = inlined_call_operand.vmem [shape: f32[8,1], index: 4, kind: input, shape index: {}]
  %s5 = inlined_call_operand.vmem [shape: f32[16,28], index: 5, kind: input, shape index: {}]
  %s6 = inlined_call_operand.vmem [shape: f32[16,1], index: 6, kind: input, shape index: {}]
  %s7 = inlined_call_operand.hbm [shape: f32[2,16,16], index: 7, kind: output, shape index: {}]
  %s8 = sld [smem:[#allocation0]]
  $region38: #{tpu_custom_call.1} parent=0
    _
  %s10 = ssub.s32 1, %s8
  %s11 = scalar_select 0, %s10, %s8
  $region1: #{tpu_custom_call.1} parent=0
    #allocation2 [shape = 'u8[16384]{0}', space=vmem, size = 0x4000, scoped, tag = 'output window, operand 0, single buffered']
    #allocation3 [shape = 's32[1]{0}', space=sflag, size = 0x4, scoped, tag = 'scoped memory for tpu_custom_call.1']
    %12 = vsyncpa [#allocation3], 0
    // Predicated region
    $region2: #{tpu_custom_call.1} parent=1 // pred_check
      _
    $region3: #{tpu_custom_call.1} parent=1 // pred_check_branch
      %14 = sbr.rel (0) target = $region5
    $region4: #{tpu_custom_call.1} parent=1 // pred_region
      _
    $region5: #{tpu_custom_call.1} parent=1 // pred_fallthru
      _
    // Predicated region
    $region6: #{tpu_custom_call.1} parent=1 // pred_check
      _
    $region7: #{tpu_custom_call.1} parent=1 // pred_check_branch
      %16 = sbr.rel (0) target = $region9
    $region8: #{tpu_custom_call.1} parent=1 // pred_region
      _
    $region9: #{tpu_custom_call.1} parent=1 // pred_fallthru
      _
    // Predicated region
    $region10: #{tpu_custom_call.1} parent=1 // pred_check
      _
    $region11: #{tpu_custom_call.1} parent=1 // pred_check_branch
      %18 = sbr.rel (0) target = $region13
    $region12: #{tpu_custom_call.1} parent=1 // pred_region
      _
    $region13: #{tpu_custom_call.1} parent=1 // pred_fallthru
      _
    // Predicated region
    $region14: #{tpu_custom_call.1} parent=1 // pred_check
      _
    $region15: #{tpu_custom_call.1} parent=1 // pred_check_branch
      %20 = sbr.rel (0) target = $region17
    $region16: #{tpu_custom_call.1} parent=1 // pred_region
      _
    $region17: #{tpu_custom_call.1} parent=1 // pred_fallthru
      _
    // Predicated region
    $region18: #{tpu_custom_call.1} parent=1 // pred_check
      _
    $region19: #{tpu_custom_call.1} parent=1 // pred_check_branch
      %22 = sbr.rel (0) target = $region21
    $region20: #{tpu_custom_call.1} parent=1 // pred_region
      _
    $region21: #{tpu_custom_call.1} parent=1 // pred_fallthru
      _
    // Predicated region
    $region22: #{tpu_custom_call.1} parent=1 // pred_check
      _
    $region23: #{tpu_custom_call.1} parent=1 // pred_check_branch
      %24 = sbr.rel (0) target = $region25
    $region24: #{tpu_custom_call.1} parent=1 // pred_region
      _
    $region25: #{tpu_custom_call.1} parent=1 // pred_fallthru
      _
    // Predicated region
    $region26: #{tpu_custom_call.1} parent=1 // pred_check
      _
    $region27: #{tpu_custom_call.1} parent=1 // pred_check_branch
      %26 = sbr.rel (0) target = $region29
    $region28: #{tpu_custom_call.1} parent=1 // pred_region
      _
    $region29: #{tpu_custom_call.1} parent=1 // pred_fallthru
      _
    %v27 = vld [vmem:[%s0] sm:$0xf]
    %v28 = vld [vmem:[%s0 + $0x4] sm:$0xf]
    %30 = vrot.lane.b32.xlu0 %v28, 16
    %v31 = vpop.permute.xlu0 %30
    %vm33 = vcmask 130048
    %v34 = vsel %vm33, %v27, %v31
    %v35 = vlaneseq
    %v36 = vand.u32 %v35, 127
    %vm37 = vcmp.lt.s32.totalorder %v36, 0
    %v38 = vsub.s32 0, %v36
    %v39 = vsel %vm37, %v38, %v36
    %v40 = vshrl.u32 %v39, 4
    %v41 = vand.u32 %v39, 15
    %v42 = vsub.s32 0, %v41
    %v43 = vsel %vm37, %v42, %v41
    %vm44 = vcmp.ne.s32.totalorder %v43, 0
    %vm45 = vcmp.lt.s32.totalorder %v43, 0
    %vm46 = vmand %vm45, %vm44
    %v47 = vadd.s32 %v43, 16
    %v48 = vsel %vm46, %v47, %v43
    %vm49 = vcmp.ne.s32.totalorder %v48, 0
    %v50 = vsel %vm49, 1, 0
    %v51 = vcvt.s32.f32 %v50
    %vm52 = vcmp.ne.s32.totalorder %v48, 15
    %v53 = vsel %vm52, 1, 0
    %v54 = vcvt.s32.f32 %v53
    %v55 = vld [vmem:[%s1] sm:$0xff]
    %vm56 = vcmask 1047808
    %57 = vrot.lane.b32.xlu0 %v34, 32
    %v58 = vpop.permute.xlu0 %57
    %v59 = vsel %vm56, %v58, %v34
    %60 = vrot.lane.b32.xlu0 %v59, 32
    %v61 = vpop.permute.xlu0 %60
    %v62 = vsel %vm56, %v61, %v34
    %64 = vrot.lane.b32.xlu0 %v51, 31
    %v65 = vpop.permute.xlu0 %64
    %v67 = vmul.f32 %v62, %v65
    %69 = vrot.lane.b32.xlu0 %v54, 1
    %v70 = vpop.permute.xlu0 %69
    %v72 = vmul.f32 %v62, %v70
    %v74 = vrot.slane %v34, 4
    %75 = vrot.lane.b32.xlu0 %v74, 31
    %v76 = vpop.permute.xlu0 %75
    %79 = vrot.lane.b32.xlu0 %v72, 30
    %v80 = vpop.permute.xlu0 %79
    %vm81 = vcmask 1043456
    %v82 = vsel %vm81, %v67, %v76
    %v83 = vld [vmem:[%s2] sm:$0xff]
    %85 = vset.pattern.permute.xlu0 0
    %86 = vperm.xlu0 %85, %v83
    %v87 = vpop.permute.xlu0 %86
    %90 = vrot.lane.b32.xlu0 %v82, 97
    %v91 = vpop.permute.xlu0 %90
    %92 = vrot.lane.b32.xlu0 %v80, 97
    %v93 = vpop.permute.xlu0 %92
    %vm95 = vcmask 97280
    %v97 = vsel %vm95, %v55, 0
    %v99 = vsel %vm81, %v93, 0
    %101 = vmatprep.subr.mxu0 0.0
    %102 = vmatpush1.msra.mxu0 %v91
    %103 = vmatprep.subr.mxu0 0.0
    %104 = vmatpush1.msra.mxu0 %v99
    %105 = vmatprep.subr.mxu0 0.0
    %106 = vmatpush1.msra.mxu0 0.0
    %107 = vmatprep.subr.mxu0 0.0
    %108 = vmatpush1.msra.mxu0 0.0
    %109 = vmatprep.subr.mxu0 0.0
    %110 = vmatpush1.msra.mxu0 0.0
    %111 = vmatprep.subr.mxu0 0.0
    %112 = vmatpush1.msra.mxu0 0.0
    %113 = vmatprep.subr.mxu0 0.0
    %114 = vmatpush1.msra.mxu0 0.0
    %115 = vmatprep.subr.mxu0 0.0
    %116 = vmatpush1.msra.mxu0 0.0
    %117 = vmatprep.subr.mxu0 0.0
    %118 = vmatpush1.msra.mxu0 0.0
    %119 = vmatprep.subr.mxu0 0.0
    %120 = vmatpush1.msra.mxu0 0.0
    %121 = vmatprep.subr.mxu0 0.0
    %122 = vmatpush1.msra.mxu0 0.0
    %123 = vmatprep.subr.mxu0 0.0
    %124 = vmatpush1.msra.mxu0 0.0
    %125 = vmatprep.subr.mxu0 0.0
    %126 = vmatpush1.msra.mxu0 0.0
    %127 = vmatprep.subr.mxu0 0.0
    %128 = vmatpush1.msra.mxu0 0.0
    %129 = vmatprep.subr.mxu0 0.0
    %130 = vmatpush1.msra.mxu0 0.0
    %131 = vmatprep.subr.mxu0 0.0
    %132 = vmatpush1.msra.mxu0 0.0
    %133 = vmatprep.subr.mxu0 0.0
    %134 = vmatpush1.msra.mxu0 0.0
    %135 = vmatprep.subr.mxu0 0.0
    %136 = vmatpush1.msra.mxu0 0.0
    %137 = vmatprep.subr.mxu0 0.0
    %138 = vmatpush1.msra.mxu0 0.0
    %139 = vmatprep.subr.mxu0 0.0
    %140 = vmatpush1.msra.mxu0 0.0
    %141 = vmatprep.subr.mxu0 0.0
    %142 = vmatpush1.msra.mxu0 0.0
    %143 = vmatprep.subr.mxu0 0.0
    %144 = vmatpush1.msra.mxu0 0.0
    %145 = vmatprep.subr.mxu0 0.0
    %146 = vmatpush1.msra.mxu0 0.0
    %147 = vmatprep.subr.mxu0 0.0
    %148 = vmatpush1.msra.mxu0 0.0
    %149 = vmatprep.subr.mxu0 0.0
    %150 = vmatpush1.msra.mxu0 0.0
    %151 = vmatprep.subr.mxu0 0.0
    %152 = vmatpush1.msra.mxu0 0.0
    %153 = vmatprep.subr.mxu0 0.0
    %154 = vmatpush1.msra.mxu0 0.0
    %155 = vmatprep.subr.mxu0 0.0
    %156 = vmatpush1.msra.mxu0 0.0
    %157 = vmatprep.subr.mxu0 0.0
    %158 = vmatpush1.msra.mxu0 0.0
    %159 = vmatprep.subr.mxu0 0.0
    %160 = vmatpush1.msra.mxu0 0.0
    %161 = vmatprep.subr.mxu0 0.0
    %162 = vmatpush1.msra.mxu0 0.0
    %163 = vmatprep.subr.mxu0 0.0
    %164 = vmatpush1.msra.mxu0 0.0
    %165 = vmatprep.mubr.f32.mxu0 0.0
    %166 = vmatmul.mubr.f32.gmra.mrb[0].mxu0 %v97
    %v167 = vpop.f32.mrb[0].mxu0
    %v168 = vadd.f32 %v87, %v167
    %v169 = vpop.f32.mrb[0].mxu0
    %170 = vdwg.mxu0
    %vm171 = vcmask 261120
    %v172 = vsel %vm171, %v168, 0.0
    %173 = vadd.xlane.f32.xlu0 %v172
    %v174 = vpop.xlane.xlu0 %173
    %v175 = vrcp.pop 32.0
    %v176 = vmul.f32 %v174, %v175
    %v177 = vsub.f32 %v168, %v176
    %v178 = vmul.f32 %v177, %v177
    %v179 = vsel %vm171, %v178, 0.0
    %180 = vadd.xlane.f32.xlu0 %v179
    %v181 = vpop.xlane.xlu0 %180
    %v182 = vmul.f32 %v181, %v175
    %v183 = vld [vmem:[%s3] sm:$0xff]
    %v184 = vadd.f32 %v182, 1e-05
    %v185 = vrsqrt.pop %v184
    %v186 = vmul.f32 %v183, %v185
    %188 = vset.pattern.permute.xlu0 0
    %189 = vperm.xlu0 %188, %v186
    %v190 = vpop.permute.xlu0 %189
    %v192 = vmul.f32 %v177, %v190
    %v193 = vld [vmem:[%s4] sm:$0xff]
    %195 = vset.pattern.permute.xlu0 0
    %196 = vperm.xlu0 %195, %v193
    %v197 = vpop.permute.xlu0 %196
    %v199 = vadd.f32 %v192, %v197
    %v200 = vmax.f32 %v199, 0.0
    %201 = vrot.lane.b32.xlu0 %v200, 32
    %v202 = vpop.permute.xlu0 %201
    %v203 = vsel %vm56, %v202, %v200
    %204 = vrot.lane.b32.xlu0 %v203, 32
    %v205 = vpop.permute.xlu0 %204
    %v206 = vsel %vm56, %v205, %v200
    %v207 = vmul.f32 %v206, %v65
    %v208 = vmul.f32 %v206, %v70
    %210 = vrot.lane.b32.xlu0 %v200, 31
    %v211 = vpop.permute.xlu0 %210
    %213 = vrot.lane.b32.xlu0 %v208, 30
    %v214 = vpop.permute.xlu0 %213
    %215 = vrot.lane.b32.xlu0 %v34, 31
    %v216 = vpop.permute.xlu0 %215
    %v217 = vld [vmem:[%s5] sm:$0xff]
    %v218 = vld [vmem:[%s5 + $0x8] sm:$0xff]
    %v219 = vld [vmem:[%s6] sm:$0xff]
    %v220 = vld [vmem:[%s6 + $0x8] sm:$0xff]
    %222 = vset.pattern.permute.xlu0 0
    %223 = vperm.xlu0 %222, %v219
    %v224 = vpop.permute.xlu0 %223
    %227 = vset.pattern.permute.xlu0 0
    %228 = vperm.xlu0 %227, %v220
    %v229 = vpop.permute.xlu0 %228
    %232 = vrot.lane.b32.xlu0 %v207, 97
    %v233 = vpop.permute.xlu0 %232
    %234 = vrot.lane.b32.xlu0 %v211, 97
    %v235 = vpop.permute.xlu0 %234
    %236 = vrot.lane.b32.xlu0 %v214, 97
    %v237 = vpop.permute.xlu0 %236
    %238 = vrot.lane.b32.xlu0 %v216, 97
    %v239 = vpop.permute.xlu0 %238
    %vm243 = vcmask 228352
    %v245 = vsel %vm243, %v217, 0
    %v248 = vsel %vm243, %v218, 0
    %v250 = vsel %vm81, %v239, 0
    %252 = vmatprep.subr.mxu0 0.0
    %253 = vmatpush1.msra.mxu0 %v233
    %254 = vmatprep.subr.mxu0 0.0
    %255 = vmatpush1.msra.mxu0 %v235
    %256 = vmatprep.subr.mxu0 0.0
    %257 = vmatpush1.msra.mxu0 %v237
    %258 = vmatprep.subr.mxu0 0.0
    %259 = vmatpush1.msra.mxu0 %v250
    %260 = vmatprep.subr.mxu0 0.0
    %261 = vmatpush1.msra.mxu0 0.0
    %262 = vmatprep.subr.mxu0 0.0
    %263 = vmatpush1.msra.mxu0 0.0
    %264 = vmatprep.subr.mxu0 0.0
    %265 = vmatpush1.msra.mxu0 0.0
    %266 = vmatprep.subr.mxu0 0.0
    %267 = vmatpush1.msra.mxu0 0.0
    %268 = vmatprep.subr.mxu0 0.0
    %269 = vmatpush1.msra.mxu0 0.0
    %270 = vmatprep.subr.mxu0 0.0
    %271 = vmatpush1.msra.mxu0 0.0
    %272 = vmatprep.subr.mxu0 0.0
    %273 = vmatpush1.msra.mxu0 0.0
    %274 = vmatprep.subr.mxu0 0.0
    %275 = vmatpush1.msra.mxu0 0.0
    %276 = vmatprep.subr.mxu0 0.0
    %277 = vmatpush1.msra.mxu0 0.0
    %278 = vmatprep.subr.mxu0 0.0
    %279 = vmatpush1.msra.mxu0 0.0
    %280 = vmatprep.subr.mxu0 0.0
    %281 = vmatpush1.msra.mxu0 0.0
    %282 = vmatprep.subr.mxu0 0.0
    %283 = vmatpush1.msra.mxu0 0.0
    %284 = vmatprep.subr.mxu0 0.0
    %285 = vmatpush1.msra.mxu0 0.0
    %286 = vmatprep.subr.mxu0 0.0
    %287 = vmatpush1.msra.mxu0 0.0
    %288 = vmatprep.subr.mxu0 0.0
    %289 = vmatpush1.msra.mxu0 0.0
    %290 = vmatprep.subr.mxu0 0.0
    %291 = vmatpush1.msra.mxu0 0.0
    %292 = vmatprep.subr.mxu0 0.0
    %293 = vmatpush1.msra.mxu0 0.0
    %294 = vmatprep.subr.mxu0 0.0
    %295 = vmatpush1.msra.mxu0 0.0
    %296 = vmatprep.subr.mxu0 0.0
    %297 = vmatpush1.msra.mxu0 0.0
    %298 = vmatprep.subr.mxu0 0.0
    %299 = vmatpush1.msra.mxu0 0.0
    %300 = vmatprep.subr.mxu0 0.0
    %301 = vmatpush1.msra.mxu0 0.0
    %302 = vmatprep.subr.mxu0 0.0
    %303 = vmatpush1.msra.mxu0 0.0
    %304 = vmatprep.subr.mxu0 0.0
    %305 = vmatpush1.msra.mxu0 0.0
    %306 = vmatprep.subr.mxu0 0.0
    %307 = vmatpush1.msra.mxu0 0.0
    %308 = vmatprep.subr.mxu0 0.0
    %309 = vmatpush1.msra.mxu0 0.0
    %310 = vmatprep.subr.mxu0 0.0
    %311 = vmatpush1.msra.mxu0 0.0
    %312 = vmatprep.subr.mxu0 0.0
    %313 = vmatpush1.msra.mxu0 0.0
    %314 = vmatprep.subr.mxu0 0.0
    %315 = vmatpush1.msra.mxu0 0.0
    %316 = vmatprep.mubr.f32.mxu0 0.0
    %317 = vmatmul.mubr.f32.gmra.mrb[0].mxu0 %v245
    %v318 = vpop.f32.mrb[0].mxu0
    %v319 = vadd.f32 %v224, %v318
    %v320 = vpop.f32.mrb[0].mxu0
    %321 = vmatprep.mubr.f32.mxu0 0.0
    %322 = vmatmul.mubr.f32.gmra.mrb[0].mxu0 %v248
    %v323 = vpop.f32.mrb[0].mxu0
    %v324 = vadd.f32 %v229, %v323
    %v325 = vpop.f32.mrb[0].mxu0
    %326 = vdwg.mxu0
    %327 = vst.msk [vmem:[#allocation2] sm:$0xff] %vm33, %v319
    %328 = vst.msk [vmem:[#allocation2 + $0x8] sm:$0xff] %vm33, %v324
    %331 = vrot.lane.b32.xlu0 %v319, 112
    %v332 = vpop.permute.xlu0 %331
    %333 = vrot.lane.b32.xlu0 %v324, 112
    %v334 = vpop.permute.xlu0 %333
    %s337 = scalar_lea.vmem [#allocation2], 16
    %338 = vst.msk [vmem:[%s337] sm:$0xff] %vm33, %v332
    %339 = vst.msk [vmem:[%s337 + $0x8] sm:$0xff] %vm33, %v334
    // Predicated region
    $region30: #{tpu_custom_call.1} parent=1 // pred_check
      _
    $region31: #{tpu_custom_call.1} parent=1 // pred_check_branch
      %341 = sbr.rel (0) target = $region33
    $region32: #{tpu_custom_call.1} parent=1 // pred_region
      %s343 = ssub.s32 512, 512
      %344 = vsyncadd [#allocation3], %s343
      %s345 = sshll.u32 [#allocation2], 4
      %s346 = int_to_ptr.vmem [resolvable:$true] %s345
      %351 = dma.vmem_to_hbm [thread:$0]  %s346, 512, %s7, [#allocation3], 128, 128, 8
    $region33: #{tpu_custom_call.1} parent=1 // pred_fallthru
      _
    // Predicated region
    $region34: #{tpu_custom_call.1} parent=1 // pred_check
      _
    $region35: #{tpu_custom_call.1} parent=1 // pred_check_branch
      %353 = sbr.rel (0) target = $region37
    $region36: #{tpu_custom_call.1} parent=1 // pred_region
      %354 = dma.done [#allocation3], 512
    $region37: #{tpu_custom_call.1} parent=1 // pred_fallthru
      _
    %355 = vsyncpa [#allocation3], 1

</llo_original>
